<compile_context>
chip_gen: v7x
topology: tpu7x:2x2x1
jax: 0.10.0
libtpu: 0.0.40
codegen_flags: <defaults>
</compile_context>

<pallas_src>
import jax
import jax.numpy as jnp
from jax.experimental import pallas as pl
from jax.experimental.pallas import tpu as pltpu

LN_EPS = 1e-5


def _round_up(n, m):
    return ((n + m - 1) // m) * m


def _layernorm(z, w=None, b=None):
    mu = jnp.mean(z, axis=-1, keepdims=True)
    zc = z - mu
    var = jnp.mean(zc * zc, axis=-1, keepdims=True)
    y = zc * jax.lax.rsqrt(var + LN_EPS)
    if w is not None:
        y = y * w + b
    return y


# ----------------------------------------------------------------------------
# Kernel
# ----------------------------------------------------------------------------
def _etf_kernel(x_ref, w_att_ref, dpack_ref, w1_ref, b1_ref, w2_ref,
                w_fc_ref, b_fc_ref, out_ref):
    x = x_ref[...]

    dpack = dpack_ref[...]            # (6, d) packed per-feature vectors
    b_att = dpack[0:1, :]
    ln1_w = dpack[1:2, :]
    ln1_b = dpack[2:3, :]
    b2 = dpack[3:4, :]
    ln2_w = dpack[4:5, :]
    ln2_b = dpack[5:6, :]

    # Fused fc_reshape + V-projection + out_proj + residual (seq_len == 1 attention).
    z1 = jnp.dot(x, w_att_ref[...], preferred_element_type=jnp.float32) + b_att
    h1 = _layernorm(z1, ln1_w, ln1_b)

    # Feed-forward: linear1 -> relu -> linear2
    ff = jnp.dot(h1, w1_ref[...], preferred_element_type=jnp.float32) + b1_ref[...]
    ff = jnp.maximum(ff, 0.0)
    ff = jnp.dot(ff, w2_ref[...], preferred_element_type=jnp.float32) + b2

    h2 = _layernorm(h1 + ff, ln2_w, ln2_b)

    # Final encoder LayerNorm; its affine is folded into the classifier head weights.
    enc = _layernorm(h2)

    # Classifier head, output padded to a lane-dense 128-wide slab.
    out = jnp.dot(enc, w_fc_ref[...], preferred_element_type=jnp.float32) + b_fc_ref[...]
    out_ref[...] = out.astype(out_ref.dtype)


# ----------------------------------------------------------------------------
# Wrapper
# ----------------------------------------------------------------------------
def etf_classifier_forward(x, fused, *, batch_tile=512):
    """x: (N, INPUT_DIM) float32.  fused: dict from fuse_params()."""
    N, in_dim = x.shape
    out_dim = fused["out_dim"]
    out_pad = fused["w_fc"].shape[1]          # lane-dense padded head width (multiple of 128)

    # Pick a batch tile: multiple of 8 sublanes, clamped for small N; pad N to a multiple.
    bt = max(8, min(batch_tile, _round_up(N, 8)))
    bt = _round_up(bt, 8)
    n_pad = _round_up(N, bt)
    xp = x if n_pad == N else jnp.pad(x, ((0, n_pad - N), (0, 0)))

    weights = [fused["w_att"], fused["dpack"], fused["w1"], fused["b1"],
               fused["w2"], fused["w_fc"], fused["b_fc"]]

    x_spec = pl.BlockSpec((bt, in_dim), lambda i: (i, 0))
    w_specs = [pl.BlockSpec(w.shape, lambda i: (0, 0)) for w in weights]
    out_spec = pl.BlockSpec((bt, out_pad), lambda i: (i, 0))

    out = pl.pallas_call(
        _etf_kernel,
        out_shape=jax.ShapeDtypeStruct((n_pad, out_pad), jnp.float32),
        grid_spec=pltpu.PrefetchScalarGridSpec(
            num_scalar_prefetch=0,
            grid=(n_pad // bt,),
            in_specs=[x_spec] + w_specs,
            out_specs=out_spec,
        ),
        compiler_params=pltpu.CompilerParams(
            dimension_semantics=("parallel",),
            vmem_limit_bytes=32 * 1024 * 1024,
        ),
    )(xp, *weights)

    return out[:N, :out_dim]


# ----------------------------------------------------------------------------
# Parameter construction (PyTorch-shaped "raw" params) and algebraic fusion
# ----------------------------------------------------------------------------
def init_raw_params(key, input_dim, out_dim, nhead=7, dim_ff=128):
    """Deterministic synthetic params, shapes exactly matching eTFClassifier.__init__."""
    d = input_dim + (nhead - input_dim % nhead)   # dim_padded
    assert d % nhead == 0

    keys = jax.random.split(key, 18)
    s = 0.05

    raw = {
        "nhead": nhead,
        # fc_reshape: Linear(input_dim, d)  -> weight (d, input_dim), bias (d,)
        "w_reshape": jax.random.normal(keys[0], (d, input_dim), jnp.float32) * s,
        "b_reshape": jax.random.normal(keys[1], (d,), jnp.float32) * s,
        # MultiheadAttention packed in_proj (3d, d)+(3d,), out_proj (d, d)+(d,)
        "in_proj_w": jax.random.normal(keys[2], (3 * d, d), jnp.float32) * s,
        "in_proj_b": jax.random.normal(keys[3], (3 * d,), jnp.float32) * s,
        "out_proj_w": jax.random.normal(keys[4], (d, d), jnp.float32) * s,
        "out_proj_b": jax.random.normal(keys[5], (d,), jnp.float32) * s,
        # feed-forward
        "w1": jax.random.normal(keys[6], (dim_ff, d), jnp.float32) * s,
        "b1": jax.random.normal(keys[7], (dim_ff,), jnp.float32) * s,
        "w2": jax.random.normal(keys[8], (d, dim_ff), jnp.float32) * s,
        "b2": jax.random.normal(keys[9], (d,), jnp.float32) * s,
        # LayerNorms (perturbed from 1/0 so the affine folds are actually exercised)
        "ln1_w": 1.0 + 0.1 * jax.random.normal(keys[10], (d,), jnp.float32),
        "ln1_b": 0.1 * jax.random.normal(keys[11], (d,), jnp.float32),
        "ln2_w": 1.0 + 0.1 * jax.random.normal(keys[12], (d,), jnp.float32),
        "ln2_b": 0.1 * jax.random.normal(keys[13], (d,), jnp.float32),
        "lnf_w": 1.0 + 0.1 * jax.random.normal(keys[14], (d,), jnp.float32),
        "lnf_b": 0.1 * jax.random.normal(keys[15], (d,), jnp.float32),
        # classifier head: Linear(d, out_dim)
        "w_fc": jax.random.normal(keys[16], (out_dim, d), jnp.float32) * s,
        "b_fc": jax.random.normal(keys[17], (out_dim,), jnp.float32) * s,
    }
    return raw


def fuse_params(raw):
    """Pre-fuse weights for the kernel (all algebra is exact up to float reassociation)."""
    d = raw["w_reshape"].shape[0]
    out_dim = raw["w_fc"].shape[0]
    out_pad = _round_up(out_dim, 128)

    w_r = raw["w_reshape"].T                 # (in, d)
    b_r = raw["b_reshape"]                   # (d,)
    w_v = raw["in_proj_w"][2 * d:].T         # (d, d)   V rows of in_proj, transposed
    b_v = raw["in_proj_b"][2 * d:]           # (d,)
    w_o = raw["out_proj_w"].T                # (d, d)
    b_o = raw["out_proj_b"]                  # (d,)

    # h0 + attn == h0 @ (I + Wv Wo) + bv Wo + bo  (seq_len == 1 => attention is linear)
    m = jnp.eye(d, dtype=jnp.float32) + w_v @ w_o
    w_att = w_r @ m                          # (in, d)
    b_att = b_r @ m + b_v @ w_o + b_o        # (d,)

    # Fold final LayerNorm affine into the classifier head.
    w_fc = raw["lnf_w"][:, None] * raw["w_fc"].T      # (d, out_dim)
    b_fc = raw["lnf_b"] @ raw["w_fc"].T + raw["b_fc"]  # (out_dim,)

    # Pad head to a lane-dense width (multiple of 128); wrapper slices [:, :out_dim].
    w_fc_pad = jnp.zeros((d, out_pad), jnp.float32).at[:, :out_dim].set(w_fc)
    b_fc_pad = jnp.zeros((1, out_pad), jnp.float32).at[0, :out_dim].set(b_fc)

    dpack = jnp.stack([b_att, raw["ln1_w"], raw["ln1_b"],
                       raw["b2"], raw["ln2_w"], raw["ln2_b"]], axis=0)   # (6, d)

    return {
        "w_att": w_att,
        "dpack": dpack,
        "w1": raw["w1"].T,                   # (d, dim_ff)
        "b1": raw["b1"].reshape(1, -1),      # (1, dim_ff)
        "w2": raw["w2"].T,                   # (dim_ff, d)
        "w_fc": w_fc_pad,                    # (d, out_pad)
        "b_fc": b_fc_pad,                    # (1, out_pad)
        "out_dim": out_dim,
    }


# ----------------------------------------------------------------------------
# Pure-JAX reference mirroring the PyTorch eval-mode forward (un-fused, full attention)
# ----------------------------------------------------------------------------
def reference_forward(x, raw):
    N = x.shape[0]
    d = raw["w_reshape"].shape[0]
    nhead = raw["nhead"]
    hd = d // nhead

    h0 = x @ raw["w_reshape"].T + raw["b_reshape"]                      # (N, d)

    q = h0 @ raw["in_proj_w"][:d].T + raw["in_proj_b"][:d]
    k = h0 @ raw["in_proj_w"][d:2 * d].T + raw["in_proj_b"][d:2 * d]
    v = h0 @ raw["in_proj_w"][2 * d:].T + raw["in_proj_b"][2 * d:]

    qh = q.reshape(N, nhead, hd)
    kh = k.reshape(N, nhead, hd)
    vh = v.reshape(N, nhead, hd)
    logits = jnp.einsum("nhd,nhd->nh", qh, kh) / jnp.sqrt(jnp.float32(hd))
    w = jax.nn.softmax(logits[:, :, None], axis=-1)    # single key -> exactly 1.0
    ctx = (w * vh).reshape(N, d)
    attn = ctx @ raw["out_proj_w"].T + raw["out_proj_b"]

    def ln(z, w_, b_):
        mu = jnp.mean(z, -1, keepdims=True)
        var = jnp.mean((z - mu) ** 2, -1, keepdims=True)
        return (z - mu) / jnp.sqrt(var + LN_EPS) * w_ + b_

    h1 = ln(h0 + attn, raw["ln1_w"], raw["ln1_b"])
    ff = jnp.maximum(h1 @ raw["w1"].T + raw["b1"], 0.0) @ raw["w2"].T + raw["b2"]
    h2 = ln(h1 + ff, raw["ln2_w"], raw["ln2_b"])
    enc = ln(h2, raw["lnf_w"], raw["lnf_b"])
    return enc @ raw["w_fc"].T + raw["b_fc"]


if __name__ == "__main__":
    INPUT_DIM = 10          # -> dim_padded = 14 (nhead=7, head_dim=2)
    OUT_DIM = 3
    N = 50                  # exercises batch padding (not a multiple of 8 / tile)

    key = jax.random.PRNGKey(0)
    k_x, k_p = jax.random.split(key)
    x = jax.random.normal(k_x, (N, INPUT_DIM), jnp.float32)

    raw = init_raw_params(k_p, INPUT_DIM, OUT_DIM)
    fused = fuse_params(raw)
    ref = reference_forward(x, raw)

    # Default (large) batch tile: single grid step at this small N.
    out1 = jax.block_until_ready(etf_classifier_forward(x, fused))
    # Small tile: multi-step grid + padding path.
    out2 = jax.block_until_ready(etf_classifier_forward(x, fused, batch_tile=16))

    assert out1.shape == (N, OUT_DIM)
    assert out2.shape == (N, OUT_DIM)
    assert jnp.allclose(out1, ref, atol=2e-5, rtol=2e-5), "mismatch vs. JAX reference (default tile)"
    assert jnp.allclose(out2, ref, atol=2e-5, rtol=2e-5), "mismatch vs. JAX reference (tile=16)"

    print("KERNEL_OK")
</pallas_src>

<mosaic_0001>
module attributes {stable_mosaic.version = 11 : i64} {
  func.func @_etf_kernel(%arg0: i32, %arg1: memref<56x10xf32, #tpu.memory_space<vmem>>, %arg2: memref<10x14xf32, #tpu.memory_space<vmem>>, %arg3: memref<6x14xf32, #tpu.memory_space<vmem>>, %arg4: memref<14x128xf32, #tpu.memory_space<vmem>>, %arg5: memref<1x128xf32, #tpu.memory_space<vmem>>, %arg6: memref<128x14xf32, #tpu.memory_space<vmem>>, %arg7: memref<14x128xf32, #tpu.memory_space<vmem>>, %arg8: memref<1x128xf32, #tpu.memory_space<vmem>>, %arg9: memref<56x128xf32, #tpu.memory_space<vmem>>) attributes {dimension_semantics = [#tpu.dimension_semantics<parallel>], iteration_bounds = array<i64: 1>, scalar_prefetch = 0 : i64, scratch_operands = 0 : i64, tpu.core_type = #tpu.core_type<tc>, window_params = [{transform_indices = @transform_0, window_bounds = array<i64: 56, 10>}, {pipeline_mode = #tpu.pipeline_mode<synchronous>, transform_indices = @transform_1, window_bounds = array<i64: 10, 14>}, {pipeline_mode = #tpu.pipeline_mode<synchronous>, transform_indices = @transform_2, window_bounds = array<i64: 6, 14>}, {pipeline_mode = #tpu.pipeline_mode<synchronous>, transform_indices = @transform_3, window_bounds = array<i64: 14, 128>}, {pipeline_mode = #tpu.pipeline_mode<synchronous>, transform_indices = @transform_4, window_bounds = array<i64: 1, 128>}, {pipeline_mode = #tpu.pipeline_mode<synchronous>, transform_indices = @transform_5, window_bounds = array<i64: 128, 14>}, {pipeline_mode = #tpu.pipeline_mode<synchronous>, transform_indices = @transform_6, window_bounds = array<i64: 14, 128>}, {pipeline_mode = #tpu.pipeline_mode<synchronous>, transform_indices = @transform_7, window_bounds = array<i64: 1, 128>}, {transform_indices = @transform_8, window_bounds = array<i64: 56, 128>}]} {
    %c0 = arith.constant 0 : index
    %c0_0 = arith.constant 0 : index
    %0 = vector.load %arg1[%c0, %c0_0] : memref<56x10xf32, #tpu.memory_space<vmem>>, vector<56x10xf32>
    %c0_1 = arith.constant 0 : index
    %c0_2 = arith.constant 0 : index
    %1 = vector.load %arg3[%c0_1, %c0_2] : memref<6x14xf32, #tpu.memory_space<vmem>>, vector<6x14xf32>
    %2 = vector.extract_strided_slice %1 {offsets = [0, 0], sizes = [1, 14], strides = [1, 1]} : vector<6x14xf32> to vector<1x14xf32>
    %3 = vector.extract_strided_slice %1 {offsets = [1, 0], sizes = [1, 14], strides = [1, 1]} : vector<6x14xf32> to vector<1x14xf32>
    %4 = vector.extract_strided_slice %1 {offsets = [2, 0], sizes = [1, 14], strides = [1, 1]} : vector<6x14xf32> to vector<1x14xf32>
    %5 = vector.extract_strided_slice %1 {offsets = [3, 0], sizes = [1, 14], strides = [1, 1]} : vector<6x14xf32> to vector<1x14xf32>
    %6 = vector.extract_strided_slice %1 {offsets = [4, 0], sizes = [1, 14], strides = [1, 1]} : vector<6x14xf32> to vector<1x14xf32>
    %7 = vector.extract_strided_slice %1 {offsets = [5, 0], sizes = [1, 14], strides = [1, 1]} : vector<6x14xf32> to vector<1x14xf32>
    %c0_3 = arith.constant 0 : index
    %c0_4 = arith.constant 0 : index
    %8 = vector.load %arg2[%c0_3, %c0_4] : memref<10x14xf32, #tpu.memory_space<vmem>>, vector<10x14xf32>
    %cst = arith.constant dense<0.000000e+00> : vector<56x14xf32>
    %9 = tpu.matmul %0, %8, %cst {dimension_numbers = #tpu.dot_dimension_numbers<[1], [0], [0], [1], [0, 0, 1, 1], [], []>} : vector<56x10xf32>, vector<10x14xf32>, vector<56x14xf32> -> vector<56x14xf32>
    %10 = vector.broadcast %2 : vector<1x14xf32> to vector<56x14xf32>
    %11 = arith.addf %9, %10 : vector<56x14xf32>
    %cst_5 = arith.constant dense<0.000000e+00> : vector<56xf32>
    %12 = vector.multi_reduction <add>, %11, %cst_5 [1] : vector<56x14xf32> to vector<56xf32>
    %13 = vector.shape_cast %12 : vector<56xf32> to vector<56x1xf32>
    %cst_6 = arith.constant 1.400000e+01 : f32
    %14 = vector.broadcast %cst_6 : f32 to vector<56x1xf32>
    %15 = arith.divf %13, %14 : vector<56x1xf32>
    %16 = vector.broadcast %15 : vector<56x1xf32> to vector<56x14xf32>
    %17 = arith.subf %11, %16 : vector<56x14xf32>
    %18 = arith.mulf %17, %17 : vector<56x14xf32>
    %cst_7 = arith.constant dense<0.000000e+00> : vector<56xf32>
    %19 = vector.multi_reduction <add>, %18, %cst_7 [1] : vector<56x14xf32> to vector<56xf32>
    %20 = vector.shape_cast %19 : vector<56xf32> to vector<56x1xf32>
    %cst_8 = arith.constant 1.400000e+01 : f32
    %21 = vector.broadcast %cst_8 : f32 to vector<56x1xf32>
    %22 = arith.divf %20, %21 : vector<56x1xf32>
    %cst_9 = arith.constant 9.99999974E-6 : f32
    %23 = vector.broadcast %cst_9 : f32 to vector<56x1xf32>
    %24 = arith.addf %22, %23 : vector<56x1xf32>
    %25 = math.rsqrt %24 : vector<56x1xf32>
    %26 = vector.broadcast %25 : vector<56x1xf32> to vector<56x14xf32>
    %27 = arith.mulf %17, %26 : vector<56x14xf32>
    %28 = vector.broadcast %3 : vector<1x14xf32> to vector<56x14xf32>
    %29 = arith.mulf %27, %28 : vector<56x14xf32>
    %30 = vector.broadcast %4 : vector<1x14xf32> to vector<56x14xf32>
    %31 = arith.addf %29, %30 : vector<56x14xf32>
    %c0_10 = arith.constant 0 : index
    %c0_11 = arith.constant 0 : index
    %32 = vector.load %arg4[%c0_10, %c0_11] : memref<14x128xf32, #tpu.memory_space<vmem>>, vector<14x128xf32>
    %cst_12 = arith.constant dense<0.000000e+00> : vector<56x128xf32>
    %33 = tpu.matmul %31, %32, %cst_12 {dimension_numbers = #tpu.dot_dimension_numbers<[1], [0], [0], [1], [0, 0, 1, 1], [], []>} : vector<56x14xf32>, vector<14x128xf32>, vector<56x128xf32> -> vector<56x128xf32>
    %c0_13 = arith.constant 0 : index
    %c0_14 = arith.constant 0 : index
    %34 = vector.load %arg5[%c0_13, %c0_14] : memref<1x128xf32, #tpu.memory_space<vmem>>, vector<1x128xf32>
    %35 = vector.broadcast %34 : vector<1x128xf32> to vector<56x128xf32>
    %36 = arith.addf %33, %35 : vector<56x128xf32>
    %cst_15 = arith.constant 0.000000e+00 : f32
    %37 = vector.broadcast %cst_15 : f32 to vector<56x128xf32>
    %38 = arith.maximumf %36, %37 : vector<56x128xf32>
    %c0_16 = arith.constant 0 : index
    %c0_17 = arith.constant 0 : index
    %39 = vector.load %arg6[%c0_16, %c0_17] : memref<128x14xf32, #tpu.memory_space<vmem>>, vector<128x14xf32>
    %cst_18 = arith.constant dense<0.000000e+00> : vector<56x14xf32>
    %40 = tpu.matmul %38, %39, %cst_18 {dimension_numbers = #tpu.dot_dimension_numbers<[1], [0], [0], [1], [0, 0, 1, 1], [], []>} : vector<56x128xf32>, vector<128x14xf32>, vector<56x14xf32> -> vector<56x14xf32>
    %41 = vector.broadcast %5 : vector<1x14xf32> to vector<56x14xf32>
    %42 = arith.addf %40, %41 : vector<56x14xf32>
    %43 = arith.addf %31, %42 : vector<56x14xf32>
    %cst_19 = arith.constant dense<0.000000e+00> : vector<56xf32>
    %44 = vector.multi_reduction <add>, %43, %cst_19 [1] : vector<56x14xf32> to vector<56xf32>
    %45 = vector.shape_cast %44 : vector<56xf32> to vector<56x1xf32>
    %cst_20 = arith.constant 1.400000e+01 : f32
    %46 = vector.broadcast %cst_20 : f32 to vector<56x1xf32>
    %47 = arith.divf %45, %46 : vector<56x1xf32>
    %48 = vector.broadcast %47 : vector<56x1xf32> to vector<56x14xf32>
    %49 = arith.subf %43, %48 : vector<56x14xf32>
    %50 = arith.mulf %49, %49 : vector<56x14xf32>
    %cst_21 = arith.constant dense<0.000000e+00> : vector<56xf32>
    %51 = vector.multi_reduction <add>, %50, %cst_21 [1] : vector<56x14xf32> to vector<56xf32>
    %52 = vector.shape_cast %51 : vector<56xf32> to vector<56x1xf32>
    %cst_22 = arith.constant 1.400000e+01 : f32
    %53 = vector.broadcast %cst_22 : f32 to vector<56x1xf32>
    %54 = arith.divf %52, %53 : vector<56x1xf32>
    %cst_23 = arith.constant 9.99999974E-6 : f32
    %55 = vector.broadcast %cst_23 : f32 to vector<56x1xf32>
    %56 = arith.addf %54, %55 : vector<56x1xf32>
    %57 = math.rsqrt %56 : vector<56x1xf32>
    %58 = vector.broadcast %57 : vector<56x1xf32> to vector<56x14xf32>
    %59 = arith.mulf %49, %58 : vector<56x14xf32>
    %60 = vector.broadcast %6 : vector<1x14xf32> to vector<56x14xf32>
    %61 = arith.mulf %59, %60 : vector<56x14xf32>
    %62 = vector.broadcast %7 : vector<1x14xf32> to vector<56x14xf32>
    %63 = arith.addf %61, %62 : vector<56x14xf32>
    %cst_24 = arith.constant dense<0.000000e+00> : vector<56xf32>
    %64 = vector.multi_reduction <add>, %63, %cst_24 [1] : vector<56x14xf32> to vector<56xf32>
    %65 = vector.shape_cast %64 : vector<56xf32> to vector<56x1xf32>
    %cst_25 = arith.constant 1.400000e+01 : f32
    %66 = vector.broadcast %cst_25 : f32 to vector<56x1xf32>
    %67 = arith.divf %65, %66 : vector<56x1xf32>
    %68 = vector.broadcast %67 : vector<56x1xf32> to vector<56x14xf32>
    %69 = arith.subf %63, %68 : vector<56x14xf32>
    %70 = arith.mulf %69, %69 : vector<56x14xf32>
    %cst_26 = arith.constant dense<0.000000e+00> : vector<56xf32>
    %71 = vector.multi_reduction <add>, %70, %cst_26 [1] : vector<56x14xf32> to vector<56xf32>
    %72 = vector.shape_cast %71 : vector<56xf32> to vector<56x1xf32>
    %cst_27 = arith.constant 1.400000e+01 : f32
    %73 = vector.broadcast %cst_27 : f32 to vector<56x1xf32>
    %74 = arith.divf %72, %73 : vector<56x1xf32>
    %cst_28 = arith.constant 9.99999974E-6 : f32
    %75 = vector.broadcast %cst_28 : f32 to vector<56x1xf32>
    %76 = arith.addf %74, %75 : vector<56x1xf32>
    %77 = math.rsqrt %76 : vector<56x1xf32>
    %78 = vector.broadcast %77 : vector<56x1xf32> to vector<56x14xf32>
    %79 = arith.mulf %69, %78 : vector<56x14xf32>
    %c0_29 = arith.constant 0 : index
    %c0_30 = arith.constant 0 : index
    %80 = vector.load %arg7[%c0_29, %c0_30] : memref<14x128xf32, #tpu.memory_space<vmem>>, vector<14x128xf32>
    %cst_31 = arith.constant dense<0.000000e+00> : vector<56x128xf32>
    %81 = tpu.matmul %79, %80, %cst_31 {dimension_numbers = #tpu.dot_dimension_numbers<[1], [0], [0], [1], [0, 0, 1, 1], [], []>} : vector<56x14xf32>, vector<14x128xf32>, vector<56x128xf32> -> vector<56x128xf32>
    %c0_32 = arith.constant 0 : index
    %c0_33 = arith.constant 0 : index
    %82 = vector.load %arg8[%c0_32, %c0_33] : memref<1x128xf32, #tpu.memory_space<vmem>>, vector<1x128xf32>
    %83 = vector.broadcast %82 : vector<1x128xf32> to vector<56x128xf32>
    %84 = arith.addf %81, %83 : vector<56x128xf32>
    %c0_34 = arith.constant 0 : index
    %c0_35 = arith.constant 0 : index
    %85 = vector.load %arg9[%c0_34, %c0_35] : memref<56x128xf32, #tpu.memory_space<vmem>>, vector<56x128xf32>
    tpu.vector_store %arg9[%c0_34, %c0_35], %84 {strides = array<i32>} : memref<56x128xf32, #tpu.memory_space<vmem>>, vector<56x128xf32>,
    return
  }
  func.func @transform_0(%arg0: i32) -> (i32, i32) {
    %c0_i32 = arith.constant 0 : i32
    %c0_i32_0 = arith.constant 0 : i32
    return %arg0, %c0_i32 : i32, i32
  }
  func.func @transform_1(%arg0: i32) -> (i32, i32) {
    %c0_i32 = arith.constant 0 : i32
    %c0_i32_0 = arith.constant 0 : i32
    %c0_i32_1 = arith.constant 0 : i32
    return %c0_i32, %c0_i32_0 : i32, i32
  }
  func.func @transform_2(%arg0: i32) -> (i32, i32) {
    %c0_i32 = arith.constant 0 : i32
    %c0_i32_0 = arith.constant 0 : i32
    %c0_i32_1 = arith.constant 0 : i32
    return %c0_i32, %c0_i32_0 : i32, i32
  }
  func.func @transform_3(%arg0: i32) -> (i32, i32) {
    %c0_i32 = arith.constant 0 : i32
    %c0_i32_0 = arith.constant 0 : i32
    %c0_i32_1 = arith.constant 0 : i32
    return %c0_i32, %c0_i32_0 : i32, i32
  }
  func.func @transform_4(%arg0: i32) -> (i32, i32) {
    %c0_i32 = arith.constant 0 : i32
    %c0_i32_0 = arith.constant 0 : i32
    %c0_i32_1 = arith.constant 0 : i32
    return %c0_i32, %c0_i32_0 : i32, i32
  }
  func.func @transform_5(%arg0: i32) -> (i32, i32) {
    %c0_i32 = arith.constant 0 : i32
    %c0_i32_0 = arith.constant 0 : i32
    %c0_i32_1 = arith.constant 0 : i32
    return %c0_i32, %c0_i32_0 : i32, i32
  }
  func.func @transform_6(%arg0: i32) -> (i32, i32) {
    %c0_i32 = arith.constant 0 : i32
    %c0_i32_0 = arith.constant 0 : i32
    %c0_i32_1 = arith.constant 0 : i32
    return %c0_i32, %c0_i32_0 : i32, i32
  }
  func.func @transform_7(%arg0: i32) -> (i32, i32) {
    %c0_i32 = arith.constant 0 : i32
    %c0_i32_0 = arith.constant 0 : i32
    %c0_i32_1 = arith.constant 0 : i32
    return %c0_i32, %c0_i32_0 : i32, i32
  }
  func.func @transform_8(%arg0: i32) -> (i32, i32) {
    %c0_i32 = arith.constant 0 : i32
    %c0_i32_0 = arith.constant 0 : i32
    return %arg0, %c0_i32 : i32, i32
  }
}

</mosaic_0001>

<llo_original>
// kernel: tpu_custom_call.1
$region0: #{tpu_custom_call.1}
  #allocation0 [shape = 'u32[]', space=smem, size = 0x4, offset = 0x4, fixed_abs, tag = 'smem constant byte address 0x4 - core index']
  #allocation1 [shape = 'u32[144,128]{1,0:T(1,128)}', space=vmem, size = 0x12000, scoped, tag = 'internal scratch']
  %s0 = inlined_call_operand.vmem [shape: f32[56,10], index: 0, kind: input, shape index: {}]
  %s1 = inlined_call_operand.vmem [shape: f32[10,14], index: 1, kind: input, shape index: {}]
  %s2 = inlined_call_operand.vmem [shape: f32[6,14], index: 2, kind: input, shape index: {}]
  %s3 = inlined_call_operand.vmem [shape: f32[14,128], index: 3, kind: input, shape index: {}]
  %s4 = inlined_call_operand.vmem [shape: f32[1,128], index: 4, kind: input, shape index: {}]
  %s5 = inlined_call_operand.vmem [shape: f32[128,14], index: 5, kind: input, shape index: {}]
  %s6 = inlined_call_operand.vmem [shape: f32[14,128], index: 6, kind: input, shape index: {}]
  %s7 = inlined_call_operand.vmem [shape: f32[1,128], index: 7, kind: input, shape index: {}]
  %s8 = inlined_call_operand.hbm [shape: f32[56,128], index: 8, kind: output, shape index: {}]
  %s9 = sld [smem:[#allocation0]]
  $region42: #{tpu_custom_call.1} parent=0
    _
  %s11 = ssub.s32 1, %s9
  %s12 = scalar_select 0, %s11, %s9
  $region1: #{tpu_custom_call.1} parent=0
    #allocation2 [shape = 'u8[28672]{0}', space=vmem, size = 0x7000, scoped, tag = 'output window, operand 0, single buffered']
    #allocation3 [shape = 's32[1]{0}', space=sflag, size = 0x4, scoped, tag = 'scoped memory for tpu_custom_call.1']
    %13 = vsyncpa [#allocation3], 0
    // Predicated region
    $region2: #{tpu_custom_call.1} parent=1 // pred_check
      _
    $region3: #{tpu_custom_call.1} parent=1 // pred_check_branch
      %15 = sbr.rel (0) target = $region5
    $region4: #{tpu_custom_call.1} parent=1 // pred_region
      _
    $region5: #{tpu_custom_call.1} parent=1 // pred_fallthru
      _
    // Predicated region
    $region6: #{tpu_custom_call.1} parent=1 // pred_check
      _
    $region7: #{tpu_custom_call.1} parent=1 // pred_check_branch
      %17 = sbr.rel (0) target = $region9
    $region8: #{tpu_custom_call.1} parent=1 // pred_region
      _
    $region9: #{tpu_custom_call.1} parent=1 // pred_fallthru
      _
    // Predicated region
    $region10: #{tpu_custom_call.1} parent=1 // pred_check
      _
    $region11: #{tpu_custom_call.1} parent=1 // pred_check_branch
      %19 = sbr.rel (0) target = $region13
    $region12: #{tpu_custom_call.1} parent=1 // pred_region
      _
    $region13: #{tpu_custom_call.1} parent=1 // pred_fallthru
      _
    // Predicated region
    $region14: #{tpu_custom_call.1} parent=1 // pred_check
      _
    $region15: #{tpu_custom_call.1} parent=1 // pred_check_branch
      %21 = sbr.rel (0) target = $region17
    $region16: #{tpu_custom_call.1} parent=1 // pred_region
      _
    $region17: #{tpu_custom_call.1} parent=1 // pred_fallthru
      _
    // Predicated region
    $region18: #{tpu_custom_call.1} parent=1 // pred_check
      _
    $region19: #{tpu_custom_call.1} parent=1 // pred_check_branch
      %23 = sbr.rel (0) target = $region21
    $region20: #{tpu_custom_call.1} parent=1 // pred_region
      _
    $region21: #{tpu_custom_call.1} parent=1 // pred_fallthru
      _
    // Predicated region
    $region22: #{tpu_custom_call.1} parent=1 // pred_check
      _
    $region23: #{tpu_custom_call.1} parent=1 // pred_check_branch
      %25 = sbr.rel (0) target = $region25
    $region24: #{tpu_custom_call.1} parent=1 // pred_region
      _
    $region25: #{tpu_custom_call.1} parent=1 // pred_fallthru
      _
    // Predicated region
    $region26: #{tpu_custom_call.1} parent=1 // pred_check
      _
    $region27: #{tpu_custom_call.1} parent=1 // pred_check_branch
      %27 = sbr.rel (0) target = $region29
    $region28: #{tpu_custom_call.1} parent=1 // pred_region
      _
    $region29: #{tpu_custom_call.1} parent=1 // pred_fallthru
      _
    // Predicated region
    $region30: #{tpu_custom_call.1} parent=1 // pred_check
      _
    $region31: #{tpu_custom_call.1} parent=1 // pred_check_branch
      %29 = sbr.rel (0) target = $region33
    $region32: #{tpu_custom_call.1} parent=1 // pred_region
      _
    $region33: #{tpu_custom_call.1} parent=1 // pred_fallthru
      _
    %v30 = vld [vmem:[%s0] sm:$0xff]
    %v31 = vld [vmem:[%s0 + $0x8] sm:$0xff]
    %v32 = vld [vmem:[%s0 + $0x10] sm:$0xff]
    %v33 = vld [vmem:[%s0 + $0x18] sm:$0xff]
    %v34 = vld [vmem:[%s0 + $0x20] sm:$0xff]
    %v35 = vld [vmem:[%s0 + $0x28] sm:$0xff]
    %v36 = vld [vmem:[%s0 + $0x30] sm:$0xff]
    %v37 = vld [vmem:[%s2] sm:$0x3f]
    %v38 = vld [vmem:[%s1] sm:$0xff]
    %v39 = vld [vmem:[%s1 + $0x8] sm:$0x3]
    %v40 = vlaneseq
    %v41 = vshrl.u32 %v40, 7
    %v42 = vsub.s32 0, %v41
    %v43 = vrot.slane %v37, %v42
    %vm44 = vcmask 80896
    %v46 = vsel %vm44, %v30, 0
    %v49 = vsel %vm44, %v31, 0
    %v52 = vsel %vm44, %v32, 0
    %v55 = vsel %vm44, %v33, 0
    %v58 = vsel %vm44, %v34, 0
    %v61 = vsel %vm44, %v35, 0
    %v64 = vsel %vm44, %v36, 0
    %vm66 = vcmask 1041408
    %v68 = vsel %vm66, %v39, 0
    %70 = vmatprep.subr.mxu0 0.0
    %71 = vmatpush1.msra.mxu0 %v38
    %72 = vmatprep.subr.mxu0 0.0
    %73 = vmatpush1.msra.mxu0 %v68
    %74 = vmatprep.subr.mxu0 0.0
    %75 = vmatpush1.msra.mxu0 0.0
    %76 = vmatprep.subr.mxu0 0.0
    %77 = vmatpush1.msra.mxu0 0.0
    %78 = vmatprep.subr.mxu0 0.0
    %79 = vmatpush1.msra.mxu0 0.0
    %80 = vmatprep.subr.mxu0 0.0
    %81 = vmatpush1.msra.mxu0 0.0
    %82 = vmatprep.subr.mxu0 0.0
    %83 = vmatpush1.msra.mxu0 0.0
    %84 = vmatprep.subr.mxu0 0.0
    %85 = vmatpush1.msra.mxu0 0.0
    %86 = vmatprep.subr.mxu0 0.0
    %87 = vmatpush1.msra.mxu0 0.0
    %88 = vmatprep.subr.mxu0 0.0
    %89 = vmatpush1.msra.mxu0 0.0
    %90 = vmatprep.subr.mxu0 0.0
    %91 = vmatpush1.msra.mxu0 0.0
    %92 = vmatprep.subr.mxu0 0.0
    %93 = vmatpush1.msra.mxu0 0.0
    %94 = vmatprep.subr.mxu0 0.0
    %95 = vmatpush1.msra.mxu0 0.0
    %96 = vmatprep.subr.mxu0 0.0
    %97 = vmatpush1.msra.mxu0 0.0
    %98 = vmatprep.subr.mxu0 0.0
    %99 = vmatpush1.msra.mxu0 0.0
    %100 = vmatprep.subr.mxu0 0.0
    %101 = vmatpush1.msra.mxu0 0.0
    %102 = vmatprep.subr.mxu0 0.0
    %103 = vmatpush1.msra.mxu0 0.0
    %104 = vmatprep.subr.mxu0 0.0
    %105 = vmatpush1.msra.mxu0 0.0
    %106 = vmatprep.subr.mxu0 0.0
    %107 = vmatpush1.msra.mxu0 0.0
    %108 = vmatprep.subr.mxu0 0.0
    %109 = vmatpush1.msra.mxu0 0.0
    %110 = vmatprep.subr.mxu0 0.0
    %111 = vmatpush1.msra.mxu0 0.0
    %112 = vmatprep.subr.mxu0 0.0
    %113 = vmatpush1.msra.mxu0 0.0
    %114 = vmatprep.subr.mxu0 0.0
    %115 = vmatpush1.msra.mxu0 0.0
    %116 = vmatprep.subr.mxu0 0.0
    %117 = vmatpush1.msra.mxu0 0.0
    %118 = vmatprep.subr.mxu0 0.0
    %119 = vmatpush1.msra.mxu0 0.0
    %120 = vmatprep.subr.mxu0 0.0
    %121 = vmatpush1.msra.mxu0 0.0
    %122 = vmatprep.subr.mxu0 0.0
    %123 = vmatpush1.msra.mxu0 0.0
    %124 = vmatprep.subr.mxu0 0.0
    %125 = vmatpush1.msra.mxu0 0.0
    %126 = vmatprep.subr.mxu0 0.0
    %127 = vmatpush1.msra.mxu0 0.0
    %128 = vmatprep.subr.mxu0 0.0
    %129 = vmatpush1.msra.mxu0 0.0
    %130 = vmatprep.subr.mxu0 0.0
    %131 = vmatpush1.msra.mxu0 0.0
    %132 = vmatprep.subr.mxu0 0.0
    %133 = vmatpush1.msra.mxu0 0.0
    %134 = vmatprep.mubr.f32.mxu0 0.0
    %135 = vmatmul.mubr.f32.gmra.mrb[0].mxu0 %v46
    %v136 = vpop.f32.mrb[0].mxu0
    %v137 = vadd.f32 %v43, %v136
    %v138 = vpop.f32.mrb[0].mxu0
    %139 = vmatprep.mubr.f32.mxu0 0.0
    %140 = vmatmul.mubr.f32.gmra.mrb[0].mxu0 %v49
    %v141 = vpop.f32.mrb[0].mxu0
    %v142 = vadd.f32 %v43, %v141
    %v143 = vpop.f32.mrb[0].mxu0
    %144 = vmatprep.mubr.f32.mxu0 0.0
    %145 = vmatmul.mubr.f32.gmra.mrb[0].mxu0 %v52
    %v146 = vpop.f32.mrb[0].mxu0
    %v147 = vadd.f32 %v43, %v146
    %v148 = vpop.f32.mrb[0].mxu0
    %149 = vmatprep.mubr.f32.mxu0 0.0
    %150 = vmatmul.mubr.f32.gmra.mrb[0].mxu0 %v55
    %v151 = vpop.f32.mrb[0].mxu0
    %v152 = vadd.f32 %v43, %v151
    %v153 = vpop.f32.mrb[0].mxu0
    %154 = vmatprep.mubr.f32.mxu0 0.0
    %155 = vmatmul.mubr.f32.gmra.mrb[0].mxu0 %v58
    %v156 = vpop.f32.mrb[0].mxu0
    %v157 = vadd.f32 %v43, %v156
    %v158 = vpop.f32.mrb[0].mxu0
    %159 = vmatprep.mubr.f32.mxu0 0.0
    %160 = vmatmul.mubr.f32.gmra.mrb[0].mxu0 %v61
    %v161 = vpop.f32.mrb[0].mxu0
    %v162 = vadd.f32 %v43, %v161
    %v163 = vpop.f32.mrb[0].mxu0
    %164 = vmatprep.mubr.f32.mxu0 0.0
    %165 = vmatmul.mubr.f32.gmra.mrb[0].mxu0 %v64
    %v166 = vpop.f32.mrb[0].mxu0
    %v167 = vadd.f32 %v43, %v166
    %v168 = vpop.f32.mrb[0].mxu0
    %169 = vdwg.mxu0
    %vm170 = vcmask 113664
    %v171 = vsel %vm170, %v137, 0.0
    %172 = vadd.xlane.f32.xlu0 %v171
    %v173 = vpop.xlane.xlu0 %172
    %v174 = vsel %vm170, %v142, 0.0
    %175 = vadd.xlane.f32.xlu0 %v174
    %v176 = vpop.xlane.xlu0 %175
    %v177 = vsel %vm170, %v147, 0.0
    %178 = vadd.xlane.f32.xlu0 %v177
    %v179 = vpop.xlane.xlu0 %178
    %v180 = vsel %vm170, %v152, 0.0
    %181 = vadd.xlane.f32.xlu0 %v180
    %v182 = vpop.xlane.xlu0 %181
    %v183 = vsel %vm170, %v157, 0.0
    %184 = vadd.xlane.f32.xlu0 %v183
    %v185 = vpop.xlane.xlu0 %184
    %v186 = vsel %vm170, %v162, 0.0
    %187 = vadd.xlane.f32.xlu0 %v186
    %v188 = vpop.xlane.xlu0 %187
    %v189 = vsel %vm170, %v167, 0.0
    %190 = vadd.xlane.f32.xlu0 %v189
    %v191 = vpop.xlane.xlu0 %190
    %v192 = vrcp.pop 14.0
    %v193 = vmul.f32 %v173, %v192
    %v194 = vmul.f32 %v176, %v192
    %v195 = vmul.f32 %v179, %v192
    %v196 = vmul.f32 %v182, %v192
    %v197 = vmul.f32 %v185, %v192
    %v198 = vmul.f32 %v188, %v192
    %v199 = vmul.f32 %v191, %v192
    %v200 = vsub.f32 %v137, %v193
    %v201 = vsub.f32 %v142, %v194
    %v202 = vsub.f32 %v147, %v195
    %v203 = vsub.f32 %v152, %v196
    %v204 = vsub.f32 %v157, %v197
    %v205 = vsub.f32 %v162, %v198
    %v206 = vsub.f32 %v167, %v199
    %v207 = vmul.f32 %v200, %v200
    %v208 = vmul.f32 %v201, %v201
    %v209 = vmul.f32 %v202, %v202
    %v210 = vmul.f32 %v203, %v203
    %v211 = vmul.f32 %v204, %v204
    %v212 = vmul.f32 %v205, %v205
    %v213 = vmul.f32 %v206, %v206
    %v214 = vsel %vm170, %v207, 0.0
    %215 = vadd.xlane.f32.xlu0 %v214
    %v216 = vpop.xlane.xlu0 %215
    %v217 = vsel %vm170, %v208, 0.0
    %218 = vadd.xlane.f32.xlu0 %v217
    %v219 = vpop.xlane.xlu0 %218
    %v220 = vsel %vm170, %v209, 0.0
    %221 = vadd.xlane.f32.xlu0 %v220
    %v222 = vpop.xlane.xlu0 %221
    %v223 = vsel %vm170, %v210, 0.0
    %224 = vadd.xlane.f32.xlu0 %v223
    %v225 = vpop.xlane.xlu0 %224
    %v226 = vsel %vm170, %v211, 0.0
    %227 = vadd.xlane.f32.xlu0 %v226
    %v228 = vpop.xlane.xlu0 %227
    %v229 = vsel %vm170, %v212, 0.0
    %230 = vadd.xlane.f32.xlu0 %v229
    %v231 = vpop.xlane.xlu0 %230
    %v232 = vsel %vm170, %v213, 0.0
    %233 = vadd.xlane.f32.xlu0 %v232
    %v234 = vpop.xlane.xlu0 %233
    %v235 = vmul.f32 %v216, %v192
    %v236 = vmul.f32 %v219, %v192
    %v237 = vmul.f32 %v222, %v192
    %v238 = vmul.f32 %v225, %v192
    %v239 = vmul.f32 %v228, %v192
    %v240 = vmul.f32 %v231, %v192
    %v241 = vmul.f32 %v234, %v192
    %v242 = vadd.f32 %v235, 1e-05
    %v243 = vadd.f32 %v236, 1e-05
    %v244 = vadd.f32 %v237, 1e-05
    %v245 = vadd.f32 %v238, 1e-05
    %v246 = vadd.f32 %v239, 1e-05
    %v247 = vadd.f32 %v240, 1e-05
    %v248 = vadd.f32 %v241, 1e-05
    %v249 = vrsqrt.pop %v242
    %v250 = vrsqrt.pop %v243
    %v251 = vrsqrt.pop %v244
    %v252 = vrsqrt.pop %v245
    %v253 = vrsqrt.pop %v246
    %v254 = vrsqrt.pop %v247
    %v255 = vrsqrt.pop %v248
    %v256 = vmul.f32 %v200, %v249
    %v257 = vmul.f32 %v201, %v250
    %v258 = vmul.f32 %v202, %v251
    %v259 = vmul.f32 %v203, %v252
    %v260 = vmul.f32 %v204, %v253
    %v261 = vmul.f32 %v205, %v254
    %v262 = vmul.f32 %v206, %v255
    %v263 = vlaneseq
    %v264 = vshrl.u32 %v263, 7
    %v265 = vsub.s32 1, %v264
    %v266 = vrot.slane %v37, %v265
    %v267 = vmul.f32 %v256, %v266
    %v268 = vmul.f32 %v257, %v266
    %v269 = vmul.f32 %v258, %v266
    %v270 = vmul.f32 %v259, %v266
    %v271 = vmul.f32 %v260, %v266
    %v272 = vmul.f32 %v261, %v266
    %v273 = vmul.f32 %v262, %v266
    %v274 = vlaneseq
    %v275 = vshrl.u32 %v274, 7
    %v276 = vsub.s32 2, %v275
    %v277 = vrot.slane %v37, %v276
    %v278 = vadd.f32 %v267, %v277
    %v279 = vadd.f32 %v268, %v277
    %v280 = vadd.f32 %v269, %v277
    %v281 = vadd.f32 %v270, %v277
    %v282 = vadd.f32 %v271, %v277
    %v283 = vadd.f32 %v272, %v277
    %v284 = vadd.f32 %v273, %v277
    %v285 = vld [vmem:[%s3] sm:$0xff]
    %v286 = vld [vmem:[%s3 + $0x8] sm:$0x3f]
    %v287 = vld [vmem:[%s4] sm:$0x1]
    %v289 = vlaneseq
    %v290 = vshrl.u32 %v289, 7
    %v291 = vsub.s32 0, %v290
    %v292 = vrot.slane %v287, %v291
    %v295 = vsel %vm170, %v278, 0
    %v298 = vsel %vm170, %v279, 0
    %v301 = vsel %vm170, %v280, 0
    %v304 = vsel %vm170, %v281, 0
    %v307 = vsel %vm170, %v282, 0
    %v310 = vsel %vm170, %v283, 0
    %v313 = vsel %vm170, %v284, 0
    %vm315 = vcmask 1045504
    %v317 = vsel %vm315, %v286, 0
    %319 = vmatprep.subr.mxu0 0.0
    %320 = vmatpush1.msra.mxu0 %v285
    %321 = vmatprep.subr.mxu0 0.0
    %322 = vmatpush1.msra.mxu0 %v317
    %323 = vmatprep.subr.mxu0 0.0
    %324 = vmatpush1.msra.mxu0 0.0
    %325 = vmatprep.subr.mxu0 0.0
    %326 = vmatpush1.msra.mxu0 0.0
    %327 = vmatprep.subr.mxu0 0.0
    %328 = vmatpush1.msra.mxu0 0.0
    %329 = vmatprep.subr.mxu0 0.0
    %330 = vmatpush1.msra.mxu0 0.0
    %331 = vmatprep.subr.mxu0 0.0
    %332 = vmatpush1.msra.mxu0 0.0
    %333 = vmatprep.subr.mxu0 0.0
    %334 = vmatpush1.msra.mxu0 0.0
    %335 = vmatprep.subr.mxu0 0.0
    %336 = vmatpush1.msra.mxu0 0.0
    %337 = vmatprep.subr.mxu0 0.0
    %338 = vmatpush1.msra.mxu0 0.0
    %339 = vmatprep.subr.mxu0 0.0
    %340 = vmatpush1.msra.mxu0 0.0
    %341 = vmatprep.subr.mxu0 0.0
    %342 = vmatpush1.msra.mxu0 0.0
    %343 = vmatprep.subr.mxu0 0.0
    %344 = vmatpush1.msra.mxu0 0.0
    %345 = vmatprep.subr.mxu0 0.0
    %346 = vmatpush1.msra.mxu0 0.0
    %347 = vmatprep.subr.mxu0 0.0
    %348 = vmatpush1.msra.mxu0 0.0
    %349 = vmatprep.subr.mxu0 0.0
    %350 = vmatpush1.msra.mxu0 0.0
    %351 = vmatprep.subr.mxu0 0.0
    %352 = vmatpush1.msra.mxu0 0.0
    %353 = vmatprep.subr.mxu0 0.0
    %354 = vmatpush1.msra.mxu0 0.0
    %355 = vmatprep.subr.mxu0 0.0
    %356 = vmatpush1.msra.mxu0 0.0
    %357 = vmatprep.subr.mxu0 0.0
    %358 = vmatpush1.msra.mxu0 0.0
    %359 = vmatprep.subr.mxu0 0.0
    %360 = vmatpush1.msra.mxu0 0.0
    %361 = vmatprep.subr.mxu0 0.0
    %362 = vmatpush1.msra.mxu0 0.0
    %363 = vmatprep.subr.mxu0 0.0
    %364 = vmatpush1.msra.mxu0 0.0
    %365 = vmatprep.subr.mxu0 0.0
    %366 = vmatpush1.msra.mxu0 0.0
    %367 = vmatprep.subr.mxu0 0.0
    %368 = vmatpush1.msra.mxu0 0.0
    %369 = vmatprep.subr.mxu0 0.0
    %370 = vmatpush1.msra.mxu0 0.0
    %371 = vmatprep.subr.mxu0 0.0
    %372 = vmatpush1.msra.mxu0 0.0
    %373 = vmatprep.subr.mxu0 0.0
    %374 = vmatpush1.msra.mxu0 0.0
    %375 = vmatprep.subr.mxu0 0.0
    %376 = vmatpush1.msra.mxu0 0.0
    %377 = vmatprep.subr.mxu0 0.0
    %378 = vmatpush1.msra.mxu0 0.0
    %379 = vmatprep.subr.mxu0 0.0
    %380 = vmatpush1.msra.mxu0 0.0
    %381 = vmatprep.subr.mxu0 0.0
    %382 = vmatpush1.msra.mxu0 0.0
    %383 = vmatprep.mubr.f32.mxu0 0.0
    %384 = vmatmul.mubr.f32.gmra.mrb[0].mxu0 %v295
    %v385 = vpop.f32.mrb[0].mxu0
    %v386 = vadd.f32 %v292, %v385
    %v387 = vpop.f32.mrb[0].mxu0
    %388 = vmatprep.mubr.f32.mxu0 0.0
    %389 = vmatmul.mubr.f32.gmra.mrb[0].mxu0 %v298
    %v390 = vpop.f32.mrb[0].mxu0
    %v391 = vadd.f32 %v292, %v390
    %v392 = vpop.f32.mrb[0].mxu0
    %393 = vmatprep.mubr.f32.mxu0 0.0
    %394 = vmatmul.mubr.f32.gmra.mrb[0].mxu0 %v301
    %v395 = vpop.f32.mrb[0].mxu0
    %v396 = vadd.f32 %v292, %v395
    %v397 = vpop.f32.mrb[0].mxu0
    %398 = vmatprep.mubr.f32.mxu0 0.0
    %399 = vmatmul.mubr.f32.gmra.mrb[0].mxu0 %v304
    %v400 = vpop.f32.mrb[0].mxu0
    %v401 = vadd.f32 %v292, %v400
    %v402 = vpop.f32.mrb[0].mxu0
    %403 = vmatprep.mubr.f32.mxu0 0.0
    %404 = vmatmul.mubr.f32.gmra.mrb[0].mxu0 %v307
    %v405 = vpop.f32.mrb[0].mxu0
    %v406 = vadd.f32 %v292, %v405
    %v407 = vpop.f32.mrb[0].mxu0
    %408 = vmatprep.mubr.f32.mxu0 0.0
    %409 = vmatmul.mubr.f32.gmra.mrb[0].mxu0 %v310
    %v410 = vpop.f32.mrb[0].mxu0
    %v411 = vadd.f32 %v292, %v410
    %v412 = vpop.f32.mrb[0].mxu0
    %413 = vmatprep.mubr.f32.mxu0 0.0
    %414 = vmatmul.mubr.f32.gmra.mrb[0].mxu0 %v313
    %v415 = vpop.f32.mrb[0].mxu0
    %v416 = vadd.f32 %v292, %v415
    %v417 = vpop.f32.mrb[0].mxu0
    %418 = vdwg.mxu0
    %v419 = vmax.f32 %v386, 0.0
    %v420 = vmax.f32 %v391, 0.0
    %v421 = vmax.f32 %v396, 0.0
    %v422 = vmax.f32 %v401, 0.0
    %v423 = vmax.f32 %v406, 0.0
    %v424 = vmax.f32 %v411, 0.0
    %v425 = vmax.f32 %v416, 0.0
    %v426 = vld [vmem:[%s5] sm:$0xff]
    %v427 = vld [vmem:[%s5 + $0x8] sm:$0xff]
    %v428 = vld [vmem:[%s5 + $0x10] sm:$0xff]
    %v429 = vld [vmem:[%s5 + $0x18] sm:$0xff]
    %v430 = vld [vmem:[%s5 + $0x20] sm:$0xff]
    %v431 = vld [vmem:[%s5 + $0x28] sm:$0xff]
    %v432 = vld [vmem:[%s5 + $0x30] sm:$0xff]
    %v433 = vld [vmem:[%s5 + $0x38] sm:$0xff]
    %v434 = vld [vmem:[%s5 + $0x40] sm:$0xff]
    %v435 = vld [vmem:[%s5 + $0x48] sm:$0xff]
    %v436 = vld [vmem:[%s5 + $0x50] sm:$0xff]
    %v437 = vld [vmem:[%s5 + $0x58] sm:$0xff]
    %v438 = vld [vmem:[%s5 + $0x60] sm:$0xff]
    %v439 = vld [vmem:[%s5 + $0x68] sm:$0xff]
    %v440 = vld [vmem:[%s5 + $0x70] sm:$0xff]
    %v441 = vld [vmem:[%s5 + $0x78] sm:$0xff]
    %v442 = vlaneseq
    %v443 = vshrl.u32 %v442, 7
    %v444 = vsub.s32 3, %v443
    %v445 = vrot.slane %v37, %v444
    %446 = vmatprep.subr.mxu0 0.0
    %447 = vmatpush1.msra.mxu0 %v426
    %448 = vmatprep.subr.mxu0 0.0
    %449 = vmatpush1.msra.mxu0 %v427
    %450 = vmatprep.subr.mxu0 0.0
    %451 = vmatpush1.msra.mxu0 %v428
    %452 = vmatprep.subr.mxu0 0.0
    %453 = vmatpush1.msra.mxu0 %v429
    %454 = vmatprep.subr.mxu0 0.0
    %455 = vmatpush1.msra.mxu0 %v430
    %456 = vmatprep.subr.mxu0 0.0
    %457 = vmatpush1.msra.mxu0 %v431
    %458 = vmatprep.subr.mxu0 0.0
    %459 = vmatpush1.msra.mxu0 %v432
    %460 = vmatprep.subr.mxu0 0.0
    %461 = vmatpush1.msra.mxu0 %v433
    %462 = vmatprep.subr.mxu0 0.0
    %463 = vmatpush1.msra.mxu0 %v434
    %464 = vmatprep.subr.mxu0 0.0
    %465 = vmatpush1.msra.mxu0 %v435
    %466 = vmatprep.subr.mxu0 0.0
    %467 = vmatpush1.msra.mxu0 %v436
    %468 = vmatprep.subr.mxu0 0.0
    %469 = vmatpush1.msra.mxu0 %v437
    %470 = vmatprep.subr.mxu0 0.0
    %471 = vmatpush1.msra.mxu0 %v438
    %472 = vmatprep.subr.mxu0 0.0
    %473 = vmatpush1.msra.mxu0 %v439
    %474 = vmatprep.subr.mxu0 0.0
    %475 = vmatpush1.msra.mxu0 %v440
    %476 = vmatprep.subr.mxu0 0.0
    %477 = vmatpush1.msra.mxu0 %v441
    %478 = vmatprep.subr.mxu0 0.0
    %479 = vmatpush1.msra.mxu0 0.0
    %480 = vmatprep.subr.mxu0 0.0
    %481 = vmatpush1.msra.mxu0 0.0
    %482 = vmatprep.subr.mxu0 0.0
    %483 = vmatpush1.msra.mxu0 0.0
    %484 = vmatprep.subr.mxu0 0.0
    %485 = vmatpush1.msra.mxu0 0.0
    %486 = vmatprep.subr.mxu0 0.0
    %487 = vmatpush1.msra.mxu0 0.0
    %488 = vmatprep.subr.mxu0 0.0
    %489 = vmatpush1.msra.mxu0 0.0
    %490 = vmatprep.subr.mxu0 0.0
    %491 = vmatpush1.msra.mxu0 0.0
    %492 = vmatprep.subr.mxu0 0.0
    %493 = vmatpush1.msra.mxu0 0.0
    %494 = vmatprep.subr.mxu0 0.0
    %495 = vmatpush1.msra.mxu0 0.0
    %496 = vmatprep.subr.mxu0 0.0
    %497 = vmatpush1.msra.mxu0 0.0
    %498 = vmatprep.subr.mxu0 0.0
    %499 = vmatpush1.msra.mxu0 0.0
    %500 = vmatprep.subr.mxu0 0.0
    %501 = vmatpush1.msra.mxu0 0.0
    %502 = vmatprep.subr.mxu0 0.0
    %503 = vmatpush1.msra.mxu0 0.0
    %504 = vmatprep.subr.mxu0 0.0
    %505 = vmatpush1.msra.mxu0 0.0
    %506 = vmatprep.subr.mxu0 0.0
    %507 = vmatpush1.msra.mxu0 0.0
    %508 = vmatprep.subr.mxu0 0.0
    %509 = vmatpush1.msra.mxu0 0.0
    %510 = vmatprep.mubr.f32.mxu0 0.0
    %511 = vmatmul.mubr.f32.gmra.mrb[0].mxu0 %v419
    %v512 = vpop.f32.mrb[0].mxu0
    %v513 = vadd.f32 %v445, %v512
    %v514 = vpop.f32.mrb[0].mxu0
    %515 = vmatprep.mubr.f32.mxu0 0.0
    %516 = vmatmul.mubr.f32.gmra.mrb[0].mxu0 %v420
    %v517 = vpop.f32.mrb[0].mxu0
    %v518 = vadd.f32 %v445, %v517
    %v519 = vpop.f32.mrb[0].mxu0
    %520 = vmatprep.mubr.f32.mxu0 0.0
    %521 = vmatmul.mubr.f32.gmra.mrb[0].mxu0 %v421
    %v522 = vpop.f32.mrb[0].mxu0
    %v523 = vadd.f32 %v445, %v522
    %v524 = vpop.f32.mrb[0].mxu0
    %525 = vmatprep.mubr.f32.mxu0 0.0
    %526 = vmatmul.mubr.f32.gmra.mrb[0].mxu0 %v422
    %v527 = vpop.f32.mrb[0].mxu0
    %v528 = vadd.f32 %v445, %v527
    %v529 = vpop.f32.mrb[0].mxu0
    %530 = vmatprep.mubr.f32.mxu0 0.0
    %531 = vmatmul.mubr.f32.gmra.mrb[0].mxu0 %v423
    %v532 = vpop.f32.mrb[0].mxu0
    %v533 = vadd.f32 %v445, %v532
    %v534 = vpop.f32.mrb[0].mxu0
    %535 = vmatprep.mubr.f32.mxu0 0.0
    %536 = vmatmul.mubr.f32.gmra.mrb[0].mxu0 %v424
    %v537 = vpop.f32.mrb[0].mxu0
    %v538 = vadd.f32 %v445, %v537
    %v539 = vpop.f32.mrb[0].mxu0
    %540 = vmatprep.mubr.f32.mxu0 0.0
    %541 = vmatmul.mubr.f32.gmra.mrb[0].mxu0 %v425
    %v542 = vpop.f32.mrb[0].mxu0
    %v543 = vadd.f32 %v445, %v542
    %v544 = vpop.f32.mrb[0].mxu0
    %545 = vdwg.mxu0
    %v546 = vadd.f32 %v278, %v513
    %v547 = vadd.f32 %v279, %v518
    %v548 = vadd.f32 %v280, %v523
    %v549 = vadd.f32 %v281, %v528
    %v550 = vadd.f32 %v282, %v533
    %v551 = vadd.f32 %v283, %v538
    %v552 = vadd.f32 %v284, %v543
    %v553 = vsel %vm170, %v546, 0.0
    %554 = vadd.xlane.f32.xlu0 %v553
    %v555 = vpop.xlane.xlu0 %554
    %v556 = vsel %vm170, %v547, 0.0
    %557 = vadd.xlane.f32.xlu0 %v556
    %v558 = vpop.xlane.xlu0 %557
    %v559 = vsel %vm170, %v548, 0.0
    %560 = vadd.xlane.f32.xlu0 %v559
    %v561 = vpop.xlane.xlu0 %560
    %v562 = vsel %vm170, %v549, 0.0
    %563 = vadd.xlane.f32.xlu0 %v562
    %v564 = vpop.xlane.xlu0 %563
    %v565 = vsel %vm170, %v550, 0.0
    %566 = vadd.xlane.f32.xlu0 %v565
    %v567 = vpop.xlane.xlu0 %566
    %v568 = vsel %vm170, %v551, 0.0
    %569 = vadd.xlane.f32.xlu0 %v568
    %v570 = vpop.xlane.xlu0 %569
    %v571 = vsel %vm170, %v552, 0.0
    %572 = vadd.xlane.f32.xlu0 %v571
    %v573 = vpop.xlane.xlu0 %572
    %v574 = vmul.f32 %v555, %v192
    %v575 = vmul.f32 %v558, %v192
    %v576 = vmul.f32 %v561, %v192
    %v577 = vmul.f32 %v564, %v192
    %v578 = vmul.f32 %v567, %v192
    %v579 = vmul.f32 %v570, %v192
    %v580 = vmul.f32 %v573, %v192
    %v581 = vsub.f32 %v546, %v574
    %v582 = vsub.f32 %v547, %v575
    %v583 = vsub.f32 %v548, %v576
    %v584 = vsub.f32 %v549, %v577
    %v585 = vsub.f32 %v550, %v578
    %v586 = vsub.f32 %v551, %v579
    %v587 = vsub.f32 %v552, %v580
    %v588 = vmul.f32 %v581, %v581
    %v589 = vmul.f32 %v582, %v582
    %v590 = vmul.f32 %v583, %v583
    %v591 = vmul.f32 %v584, %v584
    %v592 = vmul.f32 %v585, %v585
    %v593 = vmul.f32 %v586, %v586
    %v594 = vmul.f32 %v587, %v587
    %v595 = vsel %vm170, %v588, 0.0
    %596 = vadd.xlane.f32.xlu0 %v595
    %v597 = vpop.xlane.xlu0 %596
    %v598 = vsel %vm170, %v589, 0.0
    %599 = vadd.xlane.f32.xlu0 %v598
    %v600 = vpop.xlane.xlu0 %599
    %v601 = vsel %vm170, %v590, 0.0
    %602 = vadd.xlane.f32.xlu0 %v601
    %v603 = vpop.xlane.xlu0 %602
    %v604 = vsel %vm170, %v591, 0.0
    %605 = vadd.xlane.f32.xlu0 %v604
    %v606 = vpop.xlane.xlu0 %605
    %v607 = vsel %vm170, %v592, 0.0
    %608 = vadd.xlane.f32.xlu0 %v607
    %v609 = vpop.xlane.xlu0 %608
    %v610 = vsel %vm170, %v593, 0.0
    %611 = vadd.xlane.f32.xlu0 %v610
    %v612 = vpop.xlane.xlu0 %611
    %v613 = vsel %vm170, %v594, 0.0
    %614 = vadd.xlane.f32.xlu0 %v613
    %v615 = vpop.xlane.xlu0 %614
    %v616 = vmul.f32 %v597, %v192
    %v617 = vmul.f32 %v600, %v192
    %v618 = vmul.f32 %v603, %v192
    %v619 = vmul.f32 %v606, %v192
    %v620 = vmul.f32 %v609, %v192
    %v621 = vmul.f32 %v612, %v192
    %v622 = vmul.f32 %v615, %v192
    %v623 = vadd.f32 %v616, 1e-05
    %v624 = vadd.f32 %v617, 1e-05
    %v625 = vadd.f32 %v618, 1e-05
    %v626 = vadd.f32 %v619, 1e-05
    %v627 = vadd.f32 %v620, 1e-05
    %v628 = vadd.f32 %v621, 1e-05
    %v629 = vadd.f32 %v622, 1e-05
    %v630 = vrsqrt.pop %v623
    %v631 = vrsqrt.pop %v624
    %v632 = vrsqrt.pop %v625
    %v633 = vrsqrt.pop %v626
    %v634 = vrsqrt.pop %v627
    %v635 = vrsqrt.pop %v628
    %v636 = vrsqrt.pop %v629
    %v637 = vmul.f32 %v581, %v630
    %v638 = vmul.f32 %v582, %v631
    %v639 = vmul.f32 %v583, %v632
    %v640 = vmul.f32 %v584, %v633
    %v641 = vmul.f32 %v585, %v634
    %v642 = vmul.f32 %v586, %v635
    %v643 = vmul.f32 %v587, %v636
    %v644 = vlaneseq
    %v645 = vshrl.u32 %v644, 7
    %v646 = vsub.s32 4, %v645
    %v647 = vrot.slane %v37, %v646
    %v648 = vmul.f32 %v637, %v647
    %v649 = vmul.f32 %v638, %v647
    %v650 = vmul.f32 %v639, %v647
    %v651 = vmul.f32 %v640, %v647
    %v652 = vmul.f32 %v641, %v647
    %v653 = vmul.f32 %v642, %v647
    %v654 = vmul.f32 %v643, %v647
    %v655 = vlaneseq
    %v656 = vshrl.u32 %v655, 7
    %v657 = vsub.s32 5, %v656
    %v658 = vrot.slane %v37, %v657
    %v659 = vadd.f32 %v648, %v658
    %v660 = vadd.f32 %v649, %v658
    %v661 = vadd.f32 %v650, %v658
    %v662 = vadd.f32 %v651, %v658
    %v663 = vadd.f32 %v652, %v658
    %v664 = vadd.f32 %v653, %v658
    %v665 = vadd.f32 %v654, %v658
    %v666 = vsel %vm170, %v659, 0.0
    %667 = vadd.xlane.f32.xlu0 %v666
    %v668 = vpop.xlane.xlu0 %667
    %v669 = vsel %vm170, %v660, 0.0
    %670 = vadd.xlane.f32.xlu0 %v669
    %v671 = vpop.xlane.xlu0 %670
    %v672 = vsel %vm170, %v661, 0.0
    %673 = vadd.xlane.f32.xlu0 %v672
    %v674 = vpop.xlane.xlu0 %673
    %v675 = vsel %vm170, %v662, 0.0
    %676 = vadd.xlane.f32.xlu0 %v675
    %v677 = vpop.xlane.xlu0 %676
    %v678 = vsel %vm170, %v663, 0.0
    %679 = vadd.xlane.f32.xlu0 %v678
    %v680 = vpop.xlane.xlu0 %679
    %v681 = vsel %vm170, %v664, 0.0
    %682 = vadd.xlane.f32.xlu0 %v681
    %v683 = vpop.xlane.xlu0 %682
    %v684 = vsel %vm170, %v665, 0.0
    %685 = vadd.xlane.f32.xlu0 %v684
    %v686 = vpop.xlane.xlu0 %685
    %v687 = vmul.f32 %v668, %v192
    %v688 = vmul.f32 %v671, %v192
    %v689 = vmul.f32 %v674, %v192
    %v690 = vmul.f32 %v677, %v192
    %v691 = vmul.f32 %v680, %v192
    %v692 = vmul.f32 %v683, %v192
    %v693 = vmul.f32 %v686, %v192
    %v694 = vsub.f32 %v659, %v687
    %v695 = vsub.f32 %v660, %v688
    %v696 = vsub.f32 %v661, %v689
    %v697 = vsub.f32 %v662, %v690
    %v698 = vsub.f32 %v663, %v691
    %v699 = vsub.f32 %v664, %v692
    %v700 = vsub.f32 %v665, %v693
    %v701 = vmul.f32 %v694, %v694
    %v702 = vmul.f32 %v695, %v695
    %v703 = vmul.f32 %v696, %v696
    %v704 = vmul.f32 %v697, %v697
    %v705 = vmul.f32 %v698, %v698
    %v706 = vmul.f32 %v699, %v699
    %v707 = vmul.f32 %v700, %v700
    %v708 = vsel %vm170, %v701, 0.0
    %709 = vadd.xlane.f32.xlu0 %v708
    %v710 = vpop.xlane.xlu0 %709
    %v711 = vsel %vm170, %v702, 0.0
    %712 = vadd.xlane.f32.xlu0 %v711
    %v713 = vpop.xlane.xlu0 %712
    %v714 = vsel %vm170, %v703, 0.0
    %715 = vadd.xlane.f32.xlu0 %v714
    %v716 = vpop.xlane.xlu0 %715
    %v717 = vsel %vm170, %v704, 0.0
    %718 = vadd.xlane.f32.xlu0 %v717
    %v719 = vpop.xlane.xlu0 %718
    %v720 = vsel %vm170, %v705, 0.0
    %721 = vadd.xlane.f32.xlu0 %v720
    %v722 = vpop.xlane.xlu0 %721
    %v723 = vsel %vm170, %v706, 0.0
    %724 = vadd.xlane.f32.xlu0 %v723
    %v725 = vpop.xlane.xlu0 %724
    %v726 = vsel %vm170, %v707, 0.0
    %727 = vadd.xlane.f32.xlu0 %v726
    %v728 = vpop.xlane.xlu0 %727
    %v729 = vmul.f32 %v710, %v192
    %v730 = vmul.f32 %v713, %v192
    %v731 = vmul.f32 %v716, %v192
    %v732 = vmul.f32 %v719, %v192
    %v733 = vmul.f32 %v722, %v192
    %v734 = vmul.f32 %v725, %v192
    %v735 = vmul.f32 %v728, %v192
    %v736 = vadd.f32 %v729, 1e-05
    %v737 = vadd.f32 %v730, 1e-05
    %v738 = vadd.f32 %v731, 1e-05
    %v739 = vadd.f32 %v732, 1e-05
    %v740 = vadd.f32 %v733, 1e-05
    %v741 = vadd.f32 %v734, 1e-05
    %v742 = vadd.f32 %v735, 1e-05
    %v743 = vrsqrt.pop %v736
    %v744 = vrsqrt.pop %v737
    %v745 = vrsqrt.pop %v738
    %v746 = vrsqrt.pop %v739
    %v747 = vrsqrt.pop %v740
    %v748 = vrsqrt.pop %v741
    %v749 = vrsqrt.pop %v742
    %v750 = vmul.f32 %v694, %v743
    %v751 = vmul.f32 %v695, %v744
    %v752 = vmul.f32 %v696, %v745
    %v753 = vmul.f32 %v697, %v746
    %v754 = vmul.f32 %v698, %v747
    %v755 = vmul.f32 %v699, %v748
    %v756 = vmul.f32 %v700, %v749
    %v757 = vld [vmem:[%s6] sm:$0xff]
    %v758 = vld [vmem:[%s6 + $0x8] sm:$0x3f]
    %v759 = vld [vmem:[%s7] sm:$0x1]
    %v761 = vlaneseq
    %v762 = vshrl.u32 %v761, 7
    %v763 = vsub.s32 0, %v762
    %v764 = vrot.slane %v759, %v763
    %v767 = vsel %vm170, %v750, 0
    %v770 = vsel %vm170, %v751, 0
    %v773 = vsel %vm170, %v752, 0
    %v776 = vsel %vm170, %v753, 0
    %v779 = vsel %vm170, %v754, 0
    %v782 = vsel %vm170, %v755, 0
    %v785 = vsel %vm170, %v756, 0
    %v788 = vsel %vm315, %v758, 0
    %790 = vmatprep.subr.mxu0 0.0
    %791 = vmatpush1.msra.mxu0 %v757
    %792 = vmatprep.subr.mxu0 0.0
    %793 = vmatpush1.msra.mxu0 %v788
    %794 = vmatprep.subr.mxu0 0.0
    %795 = vmatpush1.msra.mxu0 0.0
    %796 = vmatprep.subr.mxu0 0.0
    %797 = vmatpush1.msra.mxu0 0.0
    %798 = vmatprep.subr.mxu0 0.0
    %799 = vmatpush1.msra.mxu0 0.0
    %800 = vmatprep.subr.mxu0 0.0
    %801 = vmatpush1.msra.mxu0 0.0
    %802 = vmatprep.subr.mxu0 0.0
    %803 = vmatpush1.msra.mxu0 0.0
    %804 = vmatprep.subr.mxu0 0.0
    %805 = vmatpush1.msra.mxu0 0.0
    %806 = vmatprep.subr.mxu0 0.0
    %807 = vmatpush1.msra.mxu0 0.0
    %808 = vmatprep.subr.mxu0 0.0
    %809 = vmatpush1.msra.mxu0 0.0
    %810 = vmatprep.subr.mxu0 0.0
    %811 = vmatpush1.msra.mxu0 0.0
    %812 = vmatprep.subr.mxu0 0.0
    %813 = vmatpush1.msra.mxu0 0.0
    %814 = vmatprep.subr.mxu0 0.0
    %815 = vmatpush1.msra.mxu0 0.0
    %816 = vmatprep.subr.mxu0 0.0
    %817 = vmatpush1.msra.mxu0 0.0
    %818 = vmatprep.subr.mxu0 0.0
    %819 = vmatpush1.msra.mxu0 0.0
    %820 = vmatprep.subr.mxu0 0.0
    %821 = vmatpush1.msra.mxu0 0.0
    %822 = vmatprep.subr.mxu0 0.0
    %823 = vmatpush1.msra.mxu0 0.0
    %824 = vmatprep.subr.mxu0 0.0
    %825 = vmatpush1.msra.mxu0 0.0
    %826 = vmatprep.subr.mxu0 0.0
    %827 = vmatpush1.msra.mxu0 0.0
    %828 = vmatprep.subr.mxu0 0.0
    %829 = vmatpush1.msra.mxu0 0.0
    %830 = vmatprep.subr.mxu0 0.0
    %831 = vmatpush1.msra.mxu0 0.0
    %832 = vmatprep.subr.mxu0 0.0
    %833 = vmatpush1.msra.mxu0 0.0
    %834 = vmatprep.subr.mxu0 0.0
    %835 = vmatpush1.msra.mxu0 0.0
    %836 = vmatprep.subr.mxu0 0.0
    %837 = vmatpush1.msra.mxu0 0.0
    %838 = vmatprep.subr.mxu0 0.0
    %839 = vmatpush1.msra.mxu0 0.0
    %840 = vmatprep.subr.mxu0 0.0
    %841 = vmatpush1.msra.mxu0 0.0
    %842 = vmatprep.subr.mxu0 0.0
    %843 = vmatpush1.msra.mxu0 0.0
    %844 = vmatprep.subr.mxu0 0.0
    %845 = vmatpush1.msra.mxu0 0.0
    %846 = vmatprep.subr.mxu0 0.0
    %847 = vmatpush1.msra.mxu0 0.0
    %848 = vmatprep.subr.mxu0 0.0
    %849 = vmatpush1.msra.mxu0 0.0
    %850 = vmatprep.subr.mxu0 0.0
    %851 = vmatpush1.msra.mxu0 0.0
    %852 = vmatprep.subr.mxu0 0.0
    %853 = vmatpush1.msra.mxu0 0.0
    %854 = vmatprep.mubr.f32.mxu0 0.0
    %855 = vmatmul.mubr.f32.gmra.mrb[0].mxu0 %v767
    %v856 = vpop.f32.mrb[0].mxu0
    %v857 = vadd.f32 %v764, %v856
    %v858 = vpop.f32.mrb[0].mxu0
    %859 = vmatprep.mubr.f32.mxu0 0.0
    %860 = vmatmul.mubr.f32.gmra.mrb[0].mxu0 %v770
    %v861 = vpop.f32.mrb[0].mxu0
    %v862 = vadd.f32 %v764, %v861
    %v863 = vpop.f32.mrb[0].mxu0
    %864 = vmatprep.mubr.f32.mxu0 0.0
    %865 = vmatmul.mubr.f32.gmra.mrb[0].mxu0 %v773
    %v866 = vpop.f32.mrb[0].mxu0
    %v867 = vadd.f32 %v764, %v866
    %v868 = vpop.f32.mrb[0].mxu0
    %869 = vmatprep.mubr.f32.mxu0 0.0
    %870 = vmatmul.mubr.f32.gmra.mrb[0].mxu0 %v776
    %v871 = vpop.f32.mrb[0].mxu0
    %v872 = vadd.f32 %v764, %v871
    %v873 = vpop.f32.mrb[0].mxu0
    %874 = vmatprep.mubr.f32.mxu0 0.0
    %875 = vmatmul.mubr.f32.gmra.mrb[0].mxu0 %v779
    %v876 = vpop.f32.mrb[0].mxu0
    %v877 = vadd.f32 %v764, %v876
    %v878 = vpop.f32.mrb[0].mxu0
    %879 = vmatprep.mubr.f32.mxu0 0.0
    %880 = vmatmul.mubr.f32.gmra.mrb[0].mxu0 %v782
    %v881 = vpop.f32.mrb[0].mxu0
    %v882 = vadd.f32 %v764, %v881
    %v883 = vpop.f32.mrb[0].mxu0
    %884 = vmatprep.mubr.f32.mxu0 0.0
    %885 = vmatmul.mubr.f32.gmra.mrb[0].mxu0 %v785
    %v886 = vpop.f32.mrb[0].mxu0
    %v887 = vadd.f32 %v764, %v886
    %v888 = vpop.f32.mrb[0].mxu0
    %889 = vdwg.mxu0
    %890 = vst [vmem:[#allocation2] sm:$0xff] %v857
    %891 = vst [vmem:[#allocation2 + $0x8] sm:$0xff] %v862
    %892 = vst [vmem:[#allocation2 + $0x10] sm:$0xff] %v867
    %893 = vst [vmem:[#allocation2 + $0x18] sm:$0xff] %v872
    %894 = vst [vmem:[#allocation2 + $0x20] sm:$0xff] %v877
    %895 = vst [vmem:[#allocation2 + $0x28] sm:$0xff] %v882
    %896 = vst [vmem:[#allocation2 + $0x30] sm:$0xff] %v887
    // Predicated region
    $region34: #{tpu_custom_call.1} parent=1 // pred_check
      _
    $region35: #{tpu_custom_call.1} parent=1 // pred_check_branch
      %898 = sbr.rel (0) target = $region37
    $region36: #{tpu_custom_call.1} parent=1 // pred_region
      %s900 = ssub.s32 896, 896
      %901 = vsyncadd [#allocation3], %s900
      %s902 = sshll.u32 [#allocation2], 4
      %s903 = int_to_ptr.vmem [resolvable:$true] %s902
      %908 = dma.vmem_to_hbm [thread:$0]  %s903, 896, %s8, [#allocation3], 128, 128, 8
    $region37: #{tpu_custom_call.1} parent=1 // pred_fallthru
      _
    // Predicated region
    $region38: #{tpu_custom_call.1} parent=1 // pred_check
      _
    $region39: #{tpu_custom_call.1} parent=1 // pred_check_branch
      %910 = sbr.rel (0) target = $region41
    $region40: #{tpu_custom_call.1} parent=1 // pred_region
      %911 = dma.done [#allocation3], 896
    $region41: #{tpu_custom_call.1} parent=1 // pred_fallthru
      _
    %912 = vsyncpa [#allocation3], 1

</llo_original>
